<compile_context>
chip_gen: v6e
topology: v6e:2x2x1
jax: 0.10.0
libtpu: 0.0.40
codegen_flags: <defaults>
</compile_context>

<pallas_src>
import jax
import jax.numpy as jnp
from jax.experimental import pallas as pl
from jax.experimental.pallas import tpu as pltpu


def _permute_kernel(x_ref, o_ref):
    # x_ref: (tHW, tC)  ->  o_ref: (tC, tHW)
    o_ref[...] = x_ref[...].T


def _round_down(v, m):
    return (v // m) * m


def _pick_channel_tile(c, cap=512):
    """Channel tile: full extent if small, else a 128-multiple (exact divisor
    of c when possible so no ragged edge tiles appear)."""
    if c <= cap:
        return c
    cap128 = max(128, _round_down(cap, 128))
    for cand in range(cap128, 127, -128):
        if c % cand == 0:
            return cand            # exact divisor -> no masked edge tiles
    return cap128                  # ragged last tile; Pallas edge masking handles it


def _pick_spatial_tile(hw, tc, itemsize, target_tile_bytes):
    """Spatial tile: lane-dense 128-multiple under a per-tile byte budget."""
    max_thw = max(128, _round_down(target_tile_bytes // max(tc * itemsize, 1), 128))
    if hw <= max_thw:
        return hw                  # full extent: always legal, never masked
    for cand in range(max_thw, 127, -128):
        if hw % cand == 0:
            return cand            # exact divisor -> no masked edge tiles
    return max_thw                 # ragged last tile (masked) — still correct


def permute_after_linear(x, *, target_tile_bytes=2 * 1024 * 1024):
    """x: (N, H, W, C) -> (N, C, H, W)   (== torch permute(0, 3, 1, 2))."""
    n, h, w, c = x.shape
    hw = h * w
    itemsize = x.dtype.itemsize

    # Free, contiguous reshape: (N, H, W, C) -> (N, H*W, C).
    x2 = x.reshape(n, hw, c)

    tc = _pick_channel_tile(c)
    thw = _pick_spatial_tile(hw, tc, itemsize, target_tile_bytes)

    # Guarantee at least two grid blocks so the second TensorCore on v7x has
    # work when n == 1 and both extents fit in a single tile.  Prefer splitting
    # the spatial axis (the lane dim of the output) over the channel axis.
    if n * pl.cdiv(c, tc) * pl.cdiv(hw, thw) < 2:
        if hw >= 256:
            thw = max(128, _round_down(pl.cdiv(hw, 2), 128))
        elif c >= 256:
            tc = max(128, _round_down(pl.cdiv(c, 2), 128))

    grid = (n, pl.cdiv(c, tc), pl.cdiv(hw, thw))

    out = pl.pallas_call(
        _permute_kernel,
        out_shape=jax.ShapeDtypeStruct((n, c, hw), x.dtype),
        grid_spec=pltpu.PrefetchScalarGridSpec(
            num_scalar_prefetch=0,
            grid=grid,
            in_specs=[
                pl.BlockSpec(
                    (pl.Squeezed(), thw, tc),
                    lambda b, ci, si: (b, si, ci),
                ),
            ],
            out_specs=pl.BlockSpec(
                (pl.Squeezed(), tc, thw),
                lambda b, ci, si: (b, ci, si),
            ),
        ),
        compiler_params=pltpu.CompilerParams(
            # Every grid point writes an independent output block: all axes
            # are parallel (lets v7x shard the grid across both TensorCores).
            dimension_semantics=("parallel", "parallel", "parallel"),
            # Double-buffered in+out tiles stay <= ~8 MiB by construction;
            # set the limit explicitly so it is safe on every generation
            # (v5e scoped default 16 MiB, v7x physical 64 MiB).
            vmem_limit_bytes=32 * 1024 * 1024,
        ),
        # Pure bandwidth op: read + write of the full activation, zero flops.
        cost_estimate=pl.CostEstimate(
            flops=0,
            transcendentals=0,
            bytes_accessed=2 * n * hw * c * itemsize,
        ),
    )(x2)

    # Free, contiguous reshape back: (N, C, H*W) -> (N, C, H, W).
    return out.reshape(n, c, h, w)


if __name__ == "__main__":
    key = jax.random.PRNGKey(0)
    k1, k2, k3, k4 = jax.random.split(key, 4)

    # Primary small shape: NHWC (2, 16, 16, 4) -> NCHW (2, 4, 16, 16).
    x = jax.random.normal(key, (2, 16, 16, 4), dtype=jnp.float32)
    y = jax.block_until_ready(permute_after_linear(x))
    ref = jnp.transpose(x, (0, 3, 1, 2))
    assert y.shape == (2, 4, 16, 16), y.shape
    assert y.dtype == x.dtype
    assert jnp.array_equal(y, ref), "mismatch vs reference permute"

    # n == 1 grid-collapse path: spatial axis is split so >= 2 blocks exist.
    x2 = jax.random.normal(k1, (1, 32, 64, 4), dtype=jnp.float32)
    y2 = jax.block_until_ready(permute_after_linear(x2))
    assert jnp.array_equal(y2, jnp.transpose(x2, (0, 3, 1, 2)))

    # n == 1, small spatial, large C: channel axis is split instead.
    x3 = jax.random.normal(k2, (1, 8, 16, 512), dtype=jnp.float32)
    y3 = jax.block_until_ready(permute_after_linear(x3))
    assert jnp.array_equal(y3, jnp.transpose(x3, (0, 3, 1, 2)))

    # Ragged spatial edge: H*W = 400 is not a multiple of 128 -> exercises the
    # masked edge-tile path after the >=2-blocks split.
    x4 = jax.random.normal(k3, (1, 20, 20, 4), dtype=jnp.float32)
    y4 = jax.block_until_ready(permute_after_linear(x4))
    assert jnp.array_equal(y4, jnp.transpose(x4, (0, 3, 1, 2)))

    # C > 512 channel-tiled path (tc picked as an exact 128-multiple divisor).
    x5 = jax.random.normal(k4, (1, 8, 16, 640), dtype=jnp.float32)
    y5 = jax.block_until_ready(permute_after_linear(x5))
    assert jnp.array_equal(y5, jnp.transpose(x5, (0, 3, 1, 2)))

    print("KERNEL_OK")
</pallas_src>

<mosaic_0001>
module attributes {stable_mosaic.version = 11 : i64} {
  func.func @_permute_kernel(%arg0: i32, %arg1: i32, %arg2: i32, %arg3: memref<1x256x4xf32, #tpu.memory_space<vmem>>, %arg4: memref<1x4x256xf32, #tpu.memory_space<vmem>>) attributes {dimension_semantics = [#tpu.dimension_semantics<parallel>, #tpu.dimension_semantics<parallel>, #tpu.dimension_semantics<parallel>], iteration_bounds = array<i64: 2, 1, 1>, scalar_prefetch = 0 : i64, scratch_operands = 0 : i64, tpu.core_type = #tpu.core_type<tc>, window_params = [{transform_indices = @transform_0, window_bounds = array<i64: 1, 256, 4>}, {transform_indices = @transform_1, window_bounds = array<i64: 1, 4, 256>}]} {
    %c0 = arith.constant 0 : index
    %c0_0 = arith.constant 0 : index
    %c0_1 = arith.constant 0 : index
    %0 = vector.load %arg3[%c0, %c0_0, %c0_1] : memref<1x256x4xf32, #tpu.memory_space<vmem>>, vector<1x256x4xf32>
    %1 = vector.shape_cast %0 : vector<1x256x4xf32> to vector<256x4xf32>
    %2 = tpu.transpose %1, [1, 0] : vector<256x4xf32> -> vector<4x256xf32>
    %c0_2 = arith.constant 0 : index
    %c0_3 = arith.constant 0 : index
    %c0_4 = arith.constant 0 : index
    %3 = vector.load %arg4[%c0_2, %c0_3, %c0_4] : memref<1x4x256xf32, #tpu.memory_space<vmem>>, vector<1x4x256xf32>
    %4 = vector.shape_cast %3 : vector<1x4x256xf32> to vector<4x256xf32>
    %5 = vector.shape_cast %2 : vector<4x256xf32> to vector<1x4x256xf32>
    tpu.vector_store %arg4[%c0_2, %c0_3, %c0_4], %5 {strides = array<i32>} : memref<1x4x256xf32, #tpu.memory_space<vmem>>, vector<1x4x256xf32>,
    return
  }
  func.func @transform_0(%arg0: i32, %arg1: i32, %arg2: i32) -> (i32, i32, i32) {
    %c0_i32 = arith.constant 0 : i32
    return %arg0, %arg2, %arg1 : i32, i32, i32
  }
  func.func @transform_1(%arg0: i32, %arg1: i32, %arg2: i32) -> (i32, i32, i32) {
    %c0_i32 = arith.constant 0 : i32
    return %arg0, %arg1, %arg2 : i32, i32, i32
  }
}

</mosaic_0001>

<llo_original>
// kernel: tpu_custom_call.1
$region0: #{tpu_custom_call.1}
  #allocation0 [shape = 'u32[]', space=smem, size = 0x4, offset = 0x4, fixed_abs, tag = 'smem constant byte address 0x4 - core index']
  #allocation1 [shape = 'u32[144,128]{1,0:T(1,128)}', space=vmem, size = 0x12000, scoped, tag = 'internal scratch']
  %s0 = inlined_call_operand.vmem [shape: f32[2,256,4], index: 0, kind: input, shape index: {}]
  %s1 = inlined_call_operand.hbm [shape: f32[2,4,256], index: 1, kind: output, shape index: {}]
  %s2 = sld [smem:[#allocation0]]
  $region37: #{tpu_custom_call.1} parent=0
    _
  %s4 = ssub.s32 1, %s2
  %s5 = scalar_select 0, %s4, %s2
  $region1: #{tpu_custom_call.1} parent=0
    #allocation2 [shape = 'u8[8192]{0}', space=vmem, size = 0x2000, scoped, tag = 'output window, operand 0']
    #allocation3 [shape = 's32[2]{0}', space=sflag, size = 0x8, scoped, tag = 'scoped memory for tpu_custom_call.1']
    %6 = vsyncpa [#allocation3], 0
    %s7 = scalar_lea.sflag [#allocation3], 1
    %8 = vsyncpa %s7, 0
    loop: start=0, step=1, limit=4
    $region2: #{tpu_custom_call.1} parent=1 // loop_pre_header
      _
    $region3: #{tpu_custom_call.1} parent=1 // loop_header
      %s10 = sphi 0, %s14
      %p11 = scmp.ge.s32.totalorder %s10, 4
      %s17 = sphi 0, %s36
      %s18 = sphi 0, %s32
      %s19 = sphi 0, %s28
      %s20 = sphi 0, %s17
      %s21 = sphi 0, %s18
      %s22 = sphi 0, %s19
      %s23 = sphi 0, %s20
      %s24 = sphi 0, %s21
      %s25 = sphi 0, %s22
      %s43 = sphi 0, %s45
      %s46 = sphi 0, %s43
      %s47 = sphi 0, %s46
      %s63 = sphi 0, %s47
      %s73 = sphi 0, %s75
      %s76 = sphi 0, %s73
      %s77 = sphi 0, %s76
      %s93 = sphi 0, %s77
    $region4: #{tpu_custom_call.1} parent=1 // loop_header_branch
      %13 = sbr.rel (%p11) target = $region8
    $region5: #{tpu_custom_call.1} parent=1 // loop_body
      %s15 = ssub.s32 %s10, 1
      %s16 = ssub.s32 %s10, 2
      %s26 = sadd.s32 1, %s19
      %p27 = scmp.ge.s32.totalorder %s26, 1
      %s28 = scalar_select %p27, 0, %s26
      %s29 = sadd.s32 1, %s18
      %s30 = scalar_select %p27, %s29, %s18
      %p31 = scmp.ge.s32.totalorder %s30, 1
      %s32 = scalar_select %p31, 0, %s30
      %s33 = sadd.s32 1, %s17
      %s34 = scalar_select %p31, %s33, %s17
      %p35 = scmp.ge.s32.totalorder %s34, 2
      %s36 = scalar_select %p35, 0, %s34
      %s37 = ssub.s32 %s17, %s36
      %s38 = ssub.s32 %s19, %s28
      %s39 = sor.u32 %s37, %s38
      %s40 = ssub.s32 %s18, %s32
      %s41 = sor.u32 %s39, %s40
      %p42 = scmp.eq.s32.totalorder %s41, 0
      %s44 = sadd.s32 %s43, 1
      %s45 = scalar_select %p42, %s43, %s44
      %p48 = pneg %p42
      %p49 = scmp.eq.s32.totalorder %s10, 1
      %p50 = por %p48, %p49
      %p51 = scmp.ne.s32.totalorder %s43, %s46
      %p52 = scmp.eq.s32.totalorder %s10, 0
      %p53 = por %p51, %p52
      %p54 = scmp.ne.s32.totalorder %s43, %s46
      %p55 = scmp.eq.s32.totalorder %s15, 1
      %p56 = por %p54, %p55
      %p57 = scmp.ne.s32.totalorder %s46, %s47
      %p58 = scmp.eq.s32.totalorder %s15, 0
      %p59 = por %p57, %p58
      %p60 = scmp.ne.s32.totalorder %s46, %s47
      %p61 = scmp.eq.s32.totalorder %s16, 1
      %p62 = por %p60, %p61
      %p64 = scmp.ne.s32.totalorder %s47, %s63
      %p65 = scmp.eq.s32.totalorder %s16, 0
      %p66 = por %p64, %p65
      %s67 = ssub.s32 %s17, %s36
      %s68 = ssub.s32 %s18, %s32
      %s69 = sor.u32 %s67, %s68
      %s70 = ssub.s32 %s19, %s28
      %s71 = sor.u32 %s69, %s70
      %p72 = scmp.eq.s32.totalorder %s71, 0
      %s74 = sadd.s32 %s73, 1
      %s75 = scalar_select %p72, %s73, %s74
      %p78 = pneg %p72
      %p79 = scmp.eq.s32.totalorder %s10, 1
      %p80 = por %p78, %p79
      %p81 = scmp.ne.s32.totalorder %s73, %s76
      %p82 = scmp.eq.s32.totalorder %s10, 0
      %p83 = por %p81, %p82
      %p84 = scmp.ne.s32.totalorder %s73, %s76
      %p85 = scmp.eq.s32.totalorder %s15, 1
      %p86 = por %p84, %p85
      %p87 = scmp.ne.s32.totalorder %s76, %s77
      %p88 = scmp.eq.s32.totalorder %s15, 0
      %p89 = por %p87, %p88
      %p90 = scmp.ne.s32.totalorder %s76, %s77
      %p91 = scmp.eq.s32.totalorder %s16, 1
      %p92 = por %p90, %p91
      %p94 = scmp.ne.s32.totalorder %s77, %s93
      %p95 = scmp.eq.s32.totalorder %s16, 0
      %p96 = por %p94, %p95
      %p97 = scmp.le.s32.totalorder 1, %s10
      %p98 = scmp.lt.s32.totalorder %s10, 3
      %p99 = pnand %p97, %p98
      %p100 = pneg %p99
      // Predicated region
      $region9: #{tpu_custom_call.1} parent=5 // pred_check
        _
      $region10: #{tpu_custom_call.1} parent=5 // pred_check_branch
        %102 = sbr.rel (%p99) target = $region12
      $region11: #{tpu_custom_call.1} parent=5 // pred_region
        %s103 = ssub.s32 %s10, 1
      $region12: #{tpu_custom_call.1} parent=5 // pred_fallthru
        _
      %p104 = scmp.lt.s32.totalorder %s10, 2
      // Predicated region
      $region13: #{tpu_custom_call.1} parent=5 // pred_check
        %p105 = pneg %p104
      $region14: #{tpu_custom_call.1} parent=5 // pred_check_branch
        %107 = sbr.rel (%p105) target = $region16
      $region15: #{tpu_custom_call.1} parent=5 // pred_region
        // Predicated region
        $region17: #{tpu_custom_call.1} parent=15 // pred_check
          %p108 = pneg %p53
        $region18: #{tpu_custom_call.1} parent=15 // pred_check_branch
          %110 = sbr.rel (%p108) target = $region20
        $region19: #{tpu_custom_call.1} parent=15 // pred_region
          %s111 = smul.u32 32, %s19
          %p112 = scmp.lt.s32.totalorder %s17, 1
          %s113 = scalar_select %p112, %s17, 1
          %p114 = scmp.lt.s32.totalorder %s111, 31
          %s115 = scalar_select %p114, %s111, 31
          %p116 = scmp.lt.s32.totalorder %s18, 0
          %s117 = scalar_select %p116, %s18, 0
          %s118 = sadd.s32 %s117, %s115
          %s119 = smul.addr %s113, 32
          %s120 = sadd.s32 %s118, %s119
          %s121 = smul.addr %s120, 8
          %s122 = scalar_lea.vmem %s0, %s121
          %s123 = smul.u32 32, %s19
        $region20: #{tpu_custom_call.1} parent=15 // pred_fallthru
          _
      $region16: #{tpu_custom_call.1} parent=5 // pred_fallthru
        _
      %p124 = scmp.le.s32.totalorder 1, %s10
      %p125 = scmp.lt.s32.totalorder %s10, 3
      %p126 = pnand %p124, %p125
      %p127 = pneg %p126
      // Predicated region
      $region21: #{tpu_custom_call.1} parent=5 // pred_check
        _
      $region22: #{tpu_custom_call.1} parent=5 // pred_check_branch
        %129 = sbr.rel (%p126) target = $region24
      $region23: #{tpu_custom_call.1} parent=5 // pred_region
        %s130 = ssub.s32 %s10, 1
        %s131 = smul.u32 32, %s22
        %p132 = scmp.lt.s32.totalorder %s20, 1
        %s133 = scalar_select %p132, %s20, 1
        %p134 = scmp.lt.s32.totalorder %s131, 31
        %s135 = scalar_select %p134, %s131, 31
        %p136 = scmp.lt.s32.totalorder %s21, 0
        %s137 = scalar_select %p136, %s21, 0
        %s138 = sadd.s32 %s137, %s135
        %s139 = smul.addr %s133, 32
        %s140 = sadd.s32 %s138, %s139
        %s141 = smul.addr %s140, 8
        %s142 = scalar_lea.vmem %s0, %s141
        %p143 = pneg %p59
        %p144 = pneg %p56
        %p145 = pneg %p89
        %p146 = pneg %p86
        %s147 = sand.u32 %s76, 1
        %s148 = scalar_lea.sflag [#allocation3], %s147
        %s149 = sand.u32 %s76, 1
        %s150 = smul.addr %s149, 8
        %s151 = scalar_lea.vmem [#allocation2], %s150
        %s152 = smul.u32 32, %s22
        %p153 = scmp.lt.s32.totalorder %s20, 1
        %s154 = scalar_select %p153, %s20, 1
        %p155 = scmp.lt.s32.totalorder %s152, 31
        %s156 = scalar_select %p155, %s152, 31
        %p157 = scmp.lt.s32.totalorder %s21, 0
        %s158 = scalar_select %p157, %s21, 0
        %s159 = sadd.s32 %s158, %s156
        %s160 = smul.addr %s154, 32
        %s161 = sadd.s32 %s159, %s160
        %s162 = smul.addr %s161, 8
        %s163 = scalar_lea.vmem %s0, %s162
        %s164 = smul.u32 32, %s22
        %s165 = smul.u32 2, %s22
        %v166 = vld [vmem:[%s163] sm:$0xff]
        %v167 = vld [vmem:[%s163 + $0x8] sm:$0xff]
        %v168 = vld [vmem:[%s163 + $0x10] sm:$0xff]
        %v169 = vld [vmem:[%s163 + $0x18] sm:$0xff]
        %v170 = vld [vmem:[%s163 + $0x20] sm:$0xff]
        %v171 = vld [vmem:[%s163 + $0x28] sm:$0xff]
        %v172 = vld [vmem:[%s163 + $0x30] sm:$0xff]
        %v173 = vld [vmem:[%s163 + $0x38] sm:$0xff]
        %v174 = vld [vmem:[%s163 + $0x40] sm:$0xff]
        %v175 = vld [vmem:[%s163 + $0x48] sm:$0xff]
        %v176 = vld [vmem:[%s163 + $0x50] sm:$0xff]
        %v177 = vld [vmem:[%s163 + $0x58] sm:$0xff]
        %v178 = vld [vmem:[%s163 + $0x60] sm:$0xff]
        %v179 = vld [vmem:[%s163 + $0x68] sm:$0xff]
        %v180 = vld [vmem:[%s163 + $0x70] sm:$0xff]
        %v181 = vld [vmem:[%s163 + $0x78] sm:$0xff]
        %v182 = vld [vmem:[%s163 + $0x80] sm:$0xff]
        %v183 = vld [vmem:[%s163 + $0x88] sm:$0xff]
        %v184 = vld [vmem:[%s163 + $0x90] sm:$0xff]
        %v185 = vld [vmem:[%s163 + $0x98] sm:$0xff]
        %v186 = vld [vmem:[%s163 + $0xa0] sm:$0xff]
        %v187 = vld [vmem:[%s163 + $0xa8] sm:$0xff]
        %v188 = vld [vmem:[%s163 + $0xb0] sm:$0xff]
        %v189 = vld [vmem:[%s163 + $0xb8] sm:$0xff]
        %v190 = vld [vmem:[%s163 + $0xc0] sm:$0xff]
        %v191 = vld [vmem:[%s163 + $0xc8] sm:$0xff]
        %v192 = vld [vmem:[%s163 + $0xd0] sm:$0xff]
        %v193 = vld [vmem:[%s163 + $0xd8] sm:$0xff]
        %v194 = vld [vmem:[%s163 + $0xe0] sm:$0xff]
        %v195 = vld [vmem:[%s163 + $0xe8] sm:$0xff]
        %v196 = vld [vmem:[%s163 + $0xf0] sm:$0xff]
        %v197 = vld [vmem:[%s163 + $0xf8] sm:$0xff]
        %198 = vxpose.xlu0.b32.start [1/16] %v166, 128
        %199 = vxpose.xlu0.b32.cont [2/16] %v167, 128
        %200 = vxpose.xlu0.b32.cont [3/16] %v168, 128
        %201 = vxpose.xlu0.b32.cont [4/16] %v169, 128
        %202 = vxpose.xlu0.b32.cont [5/16] %v170, 128
        %203 = vxpose.xlu0.b32.cont [6/16] %v171, 128
        %204 = vxpose.xlu0.b32.cont [7/16] %v172, 128
        %205 = vxpose.xlu0.b32.cont [8/16] %v173, 128
        %206 = vxpose.xlu0.b32.cont [9/16] %v174, 128
        %207 = vxpose.xlu0.b32.cont [10/16] %v175, 128
        %208 = vxpose.xlu0.b32.cont [11/16] %v176, 128
        %209 = vxpose.xlu0.b32.cont [12/16] %v177, 128
        %210 = vxpose.xlu0.b32.cont [13/16] %v178, 128
        %211 = vxpose.xlu0.b32.cont [14/16] %v179, 128
        %212 = vxpose.xlu0.b32.cont [15/16] %v180, 128
        %213 = vxpose.xlu0.b32.end [16/16] %v181, 128
        %v214 = vpop.trf.xlu0
        %v215 = vpop.trf.xlu0
        %v216 = vpop.trf.xlu0
        %v217 = vpop.trf.xlu0
        %v218 = vpop.trf.xlu0
        %v219 = vpop.trf.xlu0
        %v220 = vpop.trf.xlu0
        %v221 = vpop.trf.xlu0
        %v222 = vpop.trf.xlu0
        %v223 = vpop.trf.xlu0
        %v224 = vpop.trf.xlu0
        %v225 = vpop.trf.xlu0
        %v226 = vpop.trf.xlu0
        %v227 = vpop.trf.xlu0
        %v228 = vpop.trf.xlu0
        %v229 = vpop.trf.xlu0
        %230 = vxpose.xlu0.b32.start [1/16] %v182, 128
        %231 = vxpose.xlu0.b32.cont [2/16] %v183, 128
        %232 = vxpose.xlu0.b32.cont [3/16] %v184, 128
        %233 = vxpose.xlu0.b32.cont [4/16] %v185, 128
        %234 = vxpose.xlu0.b32.cont [5/16] %v186, 128
        %235 = vxpose.xlu0.b32.cont [6/16] %v187, 128
        %236 = vxpose.xlu0.b32.cont [7/16] %v188, 128
        %237 = vxpose.xlu0.b32.cont [8/16] %v189, 128
        %238 = vxpose.xlu0.b32.cont [9/16] %v190, 128
        %239 = vxpose.xlu0.b32.cont [10/16] %v191, 128
        %240 = vxpose.xlu0.b32.cont [11/16] %v192, 128
        %241 = vxpose.xlu0.b32.cont [12/16] %v193, 128
        %242 = vxpose.xlu0.b32.cont [13/16] %v194, 128
        %243 = vxpose.xlu0.b32.cont [14/16] %v195, 128
        %244 = vxpose.xlu0.b32.cont [15/16] %v196, 128
        %245 = vxpose.xlu0.b32.end [16/16] %v197, 128
        %v246 = vpop.trf.xlu0
        %v247 = vpop.trf.xlu0
        %v248 = vpop.trf.xlu0
        %v249 = vpop.trf.xlu0
        %v250 = vpop.trf.xlu0
        %v251 = vpop.trf.xlu0
        %v252 = vpop.trf.xlu0
        %v253 = vpop.trf.xlu0
        %v254 = vpop.trf.xlu0
        %v255 = vpop.trf.xlu0
        %v256 = vpop.trf.xlu0
        %v257 = vpop.trf.xlu0
        %v258 = vpop.trf.xlu0
        %v259 = vpop.trf.xlu0
        %v260 = vpop.trf.xlu0
        %v261 = vpop.trf.xlu0
        %v264 = vcombine.low %v214, %v246
        %266 = vst [vmem:[%s151] sm:$0xff] %v264
        %s267 = sand.u32 %s76, 1
        %s268 = scalar_lea.sflag [#allocation3], %s267
        %s269 = sand.u32 %s76, 1
        %s270 = smul.addr %s269, 8
        %s271 = scalar_lea.vmem [#allocation2], %s270
        // Predicated region
        $region25: #{tpu_custom_call.1} parent=23 // pred_check
          %p272 = pneg %p86
        $region26: #{tpu_custom_call.1} parent=23 // pred_check_branch
          %274 = sbr.rel (%p272) target = $region28
        $region27: #{tpu_custom_call.1} parent=23 // pred_region
          %s275 = smul.u32 2, %s22
          %s277 = ssub.s32 128, 128
          %278 = vsyncadd %s268, %s277
          %s279 = smul.addr %s21, 2
          %s280 = sadd.s32 %s275, %s279
          %s281 = smul.addr %s20, 2
          %s282 = sadd.s32 %s280, %s281
          %s283 = smul.addr %s282, 64
          %s284 = scalar_lea.hbm %s1, %s283
          %s286 = sshll.u32 %s271, 4
          %s287 = int_to_ptr.vmem [resolvable:$true] %s286
          %289 = dma.vmem_to_hbm [thread:$0]  %s287, 128, %s284, %s268
        $region28: #{tpu_custom_call.1} parent=23 // pred_fallthru
          _
      $region24: #{tpu_custom_call.1} parent=5 // pred_fallthru
        _
      %p290 = scmp.le.s32.totalorder 2, %s10
      // Predicated region
      $region29: #{tpu_custom_call.1} parent=5 // pred_check
        %p291 = pneg %p290
      $region30: #{tpu_custom_call.1} parent=5 // pred_check_branch
        %293 = sbr.rel (%p291) target = $region32
      $region31: #{tpu_custom_call.1} parent=5 // pred_region
        %s294 = ssub.s32 %s10, 2
        // Predicated region
        $region33: #{tpu_custom_call.1} parent=31 // pred_check
          %p295 = pneg %p92
        $region34: #{tpu_custom_call.1} parent=31 // pred_check_branch
          %297 = sbr.rel (%p295) target = $region36
        $region35: #{tpu_custom_call.1} parent=31 // pred_region
          %s298 = sand.u32 %s77, 1
          %s299 = scalar_lea.sflag [#allocation3], %s298
          %s300 = sand.u32 %s77, 1
          %s301 = smul.addr %s300, 8
          %s302 = scalar_lea.vmem [#allocation2], %s301
          %303 = dma.done %s299, 128
        $region36: #{tpu_custom_call.1} parent=31 // pred_fallthru
          _
      $region32: #{tpu_custom_call.1} parent=5 // pred_fallthru
        _
    $region6: #{tpu_custom_call.1} parent=1 // loop_footer
      %s14 = sadd.s32 1, %s10
    $region7: #{tpu_custom_call.1} parent=1 // loop_footer_branch
      %9 = sbr.rel target = $region3
    $region8: #{tpu_custom_call.1} parent=1 // loop_exit
      _
    %304 = vsyncpa [#allocation3], 1
    %s305 = scalar_lea.sflag [#allocation3], 1
    %306 = vsyncpa %s305, 1

</llo_original>
